<compile_context>
chip_gen: v7x
topology: tpu7x:2x2x1
jax: 0.10.0
libtpu: 0.0.40
codegen_flags: <defaults>
</compile_context>

<pallas_src>
import jax
import jax.numpy as jnp
from jax.experimental import pallas as pl
from jax.experimental.pallas import tpu as pltpu


# ----------------------------------------------------------------------------
# Kernel
# ----------------------------------------------------------------------------
def lstm_model_kernel(x_ref, w0_ref, w1_ref, b_ref, w_out_ref, b_out_ref, o_ref):
    """Fused forward.

    x_ref     : (Bblk, D)        input rows
    w0_ref    : (3, D, H)        layer-0 gate weights (embedding already folded in),
                                 gate order along axis 0: [i, g, o]
    w1_ref    : (3, H, H)        layer-1 gate weights, same order
    b_ref     : (6, 1, H)        fused biases: rows 0..2 layer-0, rows 3..5 layer-1
    w_out_ref : (H, out_dim)
    b_out_ref : (1, out_dim)
    o_ref     : (Bblk, out_dim)  sigmoid(logits)
    """

    def cell(inp, w_ref, bias_base):
        # Zero initial state: no w_hh dot, no forget gate, c = i * g.
        def pre(k):  # static k -> leading-axis view, no cross-lane slicing
            return (jnp.dot(inp, w_ref[k], preferred_element_type=jnp.float32)
                    + b_ref[bias_base + k])
        i = jax.nn.sigmoid(pre(0))
        g = jnp.tanh(pre(1))
        o = jax.nn.sigmoid(pre(2))
        return o * jnp.tanh(i * g)

    h1 = cell(x_ref[...], w0_ref, 0)      # embedding + LSTM layer 0 (fused)
    h2 = cell(h1, w1_ref, 3)              # LSTM layer 1 (dropout inactive in eval)

    logits = (jnp.dot(h2, w_out_ref[...], preferred_element_type=jnp.float32)
              + b_out_ref[...])
    o_ref[...] = jax.nn.sigmoid(logits)


# ----------------------------------------------------------------------------
# Wrapper
# ----------------------------------------------------------------------------
def lstm_model_forward(x, fused, *, batch_block=512):
    """x: (B, input_dim) float32. Returns (B,) (output_dim == 1 after squeeze)."""
    B, D = x.shape
    out_dim = fused["w_out"].shape[1]
    args = (x, fused["w0"], fused["w1"], fused["b"],
            fused["w_out"], fused["b_out"])

    if B % batch_block == 0 and B // batch_block > 1:
        # Batch grid: 'parallel' lets megacore / v7x dual-TC shard batch blocks
        # and bounds VMEM residency of x / out for very large B.
        bcast3 = lambda i: (0, 0, 0)
        bcast2 = lambda i: (0, 0)
        out = pl.pallas_call(
            lstm_model_kernel,
            out_shape=jax.ShapeDtypeStruct((B, out_dim), jnp.float32),
            grid=(B // batch_block,),
            in_specs=[
                pl.BlockSpec((batch_block, D), lambda i: (i, 0)),
                pl.BlockSpec(fused["w0"].shape, bcast3),
                pl.BlockSpec(fused["w1"].shape, bcast3),
                pl.BlockSpec(fused["b"].shape, bcast3),
                pl.BlockSpec(fused["w_out"].shape, bcast2),
                pl.BlockSpec(fused["b_out"].shape, bcast2),
            ],
            out_specs=pl.BlockSpec((batch_block, out_dim), lambda i: (i, 0)),
            compiler_params=pltpu.CompilerParams(
                dimension_semantics=("parallel",)),
        )(*args)
    else:
        # Small batch: single whole-array invocation (one launch, one DMA set).
        vmem = pl.BlockSpec(memory_space=pltpu.MemorySpace.VMEM)
        out = pl.pallas_call(
            lstm_model_kernel,
            out_shape=jax.ShapeDtypeStruct((B, out_dim), jnp.float32),
            in_specs=[vmem] * len(args),
            out_specs=vmem,
        )(*args)

    return jnp.squeeze(out)


# ----------------------------------------------------------------------------
# Parameters: PyTorch-style init (full params for the reference), then the
# offline algebraic folding that produces the 6 kernel operands.
# ----------------------------------------------------------------------------
def init_params(key, input_dim, hidden_dim, output_dim):
    """PyTorch-style uniform(-1/sqrt(fan), 1/sqrt(fan)). Weights stored
    pre-transposed as (in_features, out_features)."""
    keys = jax.random.split(key, 13)
    k = iter(keys)

    def u(kk, shape, fan):
        bound = 1.0 / jnp.sqrt(fan)
        return jax.random.uniform(kk, shape, jnp.float32, -bound, bound)

    H = hidden_dim
    return {
        "w_emb": u(next(k), (input_dim, H), input_dim),
        "b_emb": u(next(k), (1, H), input_dim),
        # LSTM layer 0 (gate order i, f, g, o along the 4H axis)
        "w_ih0": u(next(k), (H, 4 * H), H),
        "w_hh0": u(next(k), (H, 4 * H), H),   # dead at seq_len==1 (h_prev==0)
        "b_ih0": u(next(k), (1, 4 * H), H),
        "b_hh0": u(next(k), (1, 4 * H), H),
        # LSTM layer 1
        "w_ih1": u(next(k), (H, 4 * H), H),
        "w_hh1": u(next(k), (H, 4 * H), H),   # dead at seq_len==1
        "b_ih1": u(next(k), (1, 4 * H), H),
        "b_hh1": u(next(k), (1, 4 * H), H),
        # fc_out
        "w_out": u(next(k), (H, output_dim), H),
        "b_out": u(next(k), (1, output_dim), H),
    }


def fuse_params(p):
    """Offline folding (runs once, outside the kernel):
       * embedding Linear folded into layer-0 input projection,
       * b_ih + b_hh fused per gate,
       * forget gate and all w_hh blocks dropped (zero initial state),
       * per-gate weight blocks pre-split and stacked (no in-kernel slicing)."""
    H = p["w_emb"].shape[1]
    keep = (0, 2, 3)                       # PyTorch order i, f, g, o -> keep i, g, o

    def split(w_ih, b_ih, b_hh):
        ws = [w_ih[:, k * H:(k + 1) * H] for k in keep]
        bs = [b_ih[:, k * H:(k + 1) * H] + b_hh[:, k * H:(k + 1) * H] for k in keep]
        return ws, bs

    w0s, b0s = split(p["w_ih0"], p["b_ih0"], p["b_hh0"])
    # gates0 = x @ (w_emb @ w_ih0_gate) + (b_emb @ w_ih0_gate + b_ih0 + b_hh0)
    w0 = jnp.stack([p["w_emb"] @ w for w in w0s])                    # (3, D, H)
    b0 = [p["b_emb"] @ w + b for w, b in zip(w0s, b0s)]              # 3 x (1, H)

    w1s, b1s = split(p["w_ih1"], p["b_ih1"], p["b_hh1"])
    w1 = jnp.stack(w1s)                                              # (3, H, H)

    b = jnp.stack(b0 + b1s)                                          # (6, 1, H)
    return {"w0": w0, "w1": w1, "b": b,
            "w_out": p["w_out"], "b_out": p["b_out"]}


# ----------------------------------------------------------------------------
# Pure-JAX reference of the ORIGINAL (unfused) forward, for correctness checks.
# ----------------------------------------------------------------------------
def reference_forward(x, p):
    H = p["w_emb"].shape[1]
    emb = x @ p["w_emb"] + p["b_emb"]

    def cell(inp, w_ih, w_hh, b_ih, b_hh):
        b = inp.shape[0]
        h0 = jnp.zeros((b, H)); c0 = jnp.zeros((b, H))
        g = inp @ w_ih + h0 @ w_hh + b_ih + b_hh
        i = jax.nn.sigmoid(g[:, :H]); f = jax.nn.sigmoid(g[:, H:2 * H])
        gg = jnp.tanh(g[:, 2 * H:3 * H]); o = jax.nn.sigmoid(g[:, 3 * H:])
        c = f * c0 + i * gg
        return o * jnp.tanh(c)

    h1 = cell(emb, p["w_ih0"], p["w_hh0"], p["b_ih0"], p["b_hh0"])
    h2 = cell(h1, p["w_ih1"], p["w_hh1"], p["b_ih1"], p["b_hh1"])
    return jnp.squeeze(jax.nn.sigmoid(h2 @ p["w_out"] + p["b_out"]))


if __name__ == "__main__":
    INPUT_DIM, HIDDEN_DIM, OUTPUT_DIM = 16, 32, 1

    key = jax.random.PRNGKey(0)
    kx_small, kx_big, kp = jax.random.split(key, 3)
    params = init_params(kp, INPUT_DIM, HIDDEN_DIM, OUTPUT_DIM)
    fused = fuse_params(params)

    # Small batch: single whole-array kernel invocation.
    x_small = jax.random.normal(kx_small, (8, INPUT_DIM), jnp.float32)
    y_small = jax.block_until_ready(lstm_model_forward(x_small, fused))
    y_small_ref = reference_forward(x_small, params)
    assert y_small.shape == (8,)
    assert jnp.allclose(y_small, y_small_ref, atol=2e-5), (y_small, y_small_ref)

    # Larger batch: exercises the parallel batch-grid path (v7x dual-TC).
    x_big = jax.random.normal(kx_big, (1024, INPUT_DIM), jnp.float32)
    y_big = jax.block_until_ready(lstm_model_forward(x_big, fused, batch_block=512))
    y_big_ref = reference_forward(x_big, params)
    assert y_big.shape == (1024,)
    assert jnp.allclose(y_big, y_big_ref, atol=2e-5)

    print("KERNEL_OK")
</pallas_src>

<mosaic_0001>
module attributes {stable_mosaic.version = 11 : i64} {
  func.func @lstm_model_kernel(%arg0: memref<8x16xf32, #tpu.memory_space<vmem>>, %arg1: memref<3x16x32xf32, #tpu.memory_space<vmem>>, %arg2: memref<3x32x32xf32, #tpu.memory_space<vmem>>, %arg3: memref<6x1x32xf32, #tpu.memory_space<vmem>>, %arg4: memref<32x1xf32, #tpu.memory_space<vmem>>, %arg5: memref<1x1xf32, #tpu.memory_space<vmem>>, %arg6: memref<8x1xf32, #tpu.memory_space<vmem>>) attributes {dimension_semantics = [], scalar_prefetch = 0 : i64, scratch_operands = 0 : i64, tpu.core_type = #tpu.core_type<tc>} {
    %c0 = arith.constant 0 : index
    %c0_0 = arith.constant 0 : index
    %0 = vector.load %arg0[%c0, %c0_0] : memref<8x16xf32, #tpu.memory_space<vmem>>, vector<8x16xf32>
    %c0_1 = arith.constant 0 : index
    %c0_2 = arith.constant 0 : index
    %c0_3 = arith.constant 0 : index
    %1 = vector.load %arg1[%c0_1, %c0_2, %c0_3] : memref<3x16x32xf32, #tpu.memory_space<vmem>>, vector<1x16x32xf32>
    %2 = vector.shape_cast %1 : vector<1x16x32xf32> to vector<16x32xf32>
    %cst = arith.constant dense<0.000000e+00> : vector<8x32xf32>
    %3 = tpu.matmul %0, %2, %cst {dimension_numbers = #tpu.dot_dimension_numbers<[1], [0], [0], [1], [0, 0, 1, 1], [], []>} : vector<8x16xf32>, vector<16x32xf32>, vector<8x32xf32> -> vector<8x32xf32>
    %c0_4 = arith.constant 0 : index
    %c0_5 = arith.constant 0 : index
    %c0_6 = arith.constant 0 : index
    %4 = vector.load %arg3[%c0_4, %c0_5, %c0_6] : memref<6x1x32xf32, #tpu.memory_space<vmem>>, vector<1x1x32xf32>
    %5 = vector.shape_cast %4 : vector<1x1x32xf32> to vector<1x32xf32>
    %6 = vector.broadcast %5 : vector<1x32xf32> to vector<8x32xf32>
    %7 = arith.addf %3, %6 : vector<8x32xf32>
    %8 = arith.negf %7 : vector<8x32xf32>
    %9 = math.exp %8 : vector<8x32xf32>
    %cst_7 = arith.constant 1.000000e+00 : f32
    %10 = vector.broadcast %cst_7 : f32 to vector<8x32xf32>
    %11 = arith.addf %10, %9 : vector<8x32xf32>
    %12 = arith.divf %10, %11 : vector<8x32xf32>
    %c1 = arith.constant 1 : index
    %c0_8 = arith.constant 0 : index
    %c0_9 = arith.constant 0 : index
    %13 = vector.load %arg1[%c1, %c0_8, %c0_9] : memref<3x16x32xf32, #tpu.memory_space<vmem>>, vector<1x16x32xf32>
    %14 = vector.shape_cast %13 : vector<1x16x32xf32> to vector<16x32xf32>
    %cst_10 = arith.constant dense<0.000000e+00> : vector<8x32xf32>
    %15 = tpu.matmul %0, %14, %cst_10 {dimension_numbers = #tpu.dot_dimension_numbers<[1], [0], [0], [1], [0, 0, 1, 1], [], []>} : vector<8x16xf32>, vector<16x32xf32>, vector<8x32xf32> -> vector<8x32xf32>
    %c1_11 = arith.constant 1 : index
    %c0_12 = arith.constant 0 : index
    %c0_13 = arith.constant 0 : index
    %16 = vector.load %arg3[%c1_11, %c0_12, %c0_13] : memref<6x1x32xf32, #tpu.memory_space<vmem>>, vector<1x1x32xf32>
    %17 = vector.shape_cast %16 : vector<1x1x32xf32> to vector<1x32xf32>
    %18 = vector.broadcast %17 : vector<1x32xf32> to vector<8x32xf32>
    %19 = arith.addf %15, %18 : vector<8x32xf32>
    %20 = math.tanh %19 : vector<8x32xf32>
    %c2 = arith.constant 2 : index
    %c0_14 = arith.constant 0 : index
    %c0_15 = arith.constant 0 : index
    %21 = vector.load %arg1[%c2, %c0_14, %c0_15] : memref<3x16x32xf32, #tpu.memory_space<vmem>>, vector<1x16x32xf32>
    %22 = vector.shape_cast %21 : vector<1x16x32xf32> to vector<16x32xf32>
    %cst_16 = arith.constant dense<0.000000e+00> : vector<8x32xf32>
    %23 = tpu.matmul %0, %22, %cst_16 {dimension_numbers = #tpu.dot_dimension_numbers<[1], [0], [0], [1], [0, 0, 1, 1], [], []>} : vector<8x16xf32>, vector<16x32xf32>, vector<8x32xf32> -> vector<8x32xf32>
    %c2_17 = arith.constant 2 : index
    %c0_18 = arith.constant 0 : index
    %c0_19 = arith.constant 0 : index
    %24 = vector.load %arg3[%c2_17, %c0_18, %c0_19] : memref<6x1x32xf32, #tpu.memory_space<vmem>>, vector<1x1x32xf32>
    %25 = vector.shape_cast %24 : vector<1x1x32xf32> to vector<1x32xf32>
    %26 = vector.broadcast %25 : vector<1x32xf32> to vector<8x32xf32>
    %27 = arith.addf %23, %26 : vector<8x32xf32>
    %28 = arith.negf %27 : vector<8x32xf32>
    %29 = math.exp %28 : vector<8x32xf32>
    %cst_20 = arith.constant 1.000000e+00 : f32
    %30 = vector.broadcast %cst_20 : f32 to vector<8x32xf32>
    %31 = arith.addf %30, %29 : vector<8x32xf32>
    %32 = arith.divf %30, %31 : vector<8x32xf32>
    %33 = arith.mulf %12, %20 : vector<8x32xf32>
    %34 = math.tanh %33 : vector<8x32xf32>
    %35 = arith.mulf %32, %34 : vector<8x32xf32>
    %c0_21 = arith.constant 0 : index
    %c0_22 = arith.constant 0 : index
    %c0_23 = arith.constant 0 : index
    %36 = vector.load %arg2[%c0_21, %c0_22, %c0_23] : memref<3x32x32xf32, #tpu.memory_space<vmem>>, vector<1x32x32xf32>
    %37 = vector.shape_cast %36 : vector<1x32x32xf32> to vector<32x32xf32>
    %cst_24 = arith.constant dense<0.000000e+00> : vector<8x32xf32>
    %38 = tpu.matmul %35, %37, %cst_24 {dimension_numbers = #tpu.dot_dimension_numbers<[1], [0], [0], [1], [0, 0, 1, 1], [], []>} : vector<8x32xf32>, vector<32x32xf32>, vector<8x32xf32> -> vector<8x32xf32>
    %c3 = arith.constant 3 : index
    %c0_25 = arith.constant 0 : index
    %c0_26 = arith.constant 0 : index
    %39 = vector.load %arg3[%c3, %c0_25, %c0_26] : memref<6x1x32xf32, #tpu.memory_space<vmem>>, vector<1x1x32xf32>
    %40 = vector.shape_cast %39 : vector<1x1x32xf32> to vector<1x32xf32>
    %41 = vector.broadcast %40 : vector<1x32xf32> to vector<8x32xf32>
    %42 = arith.addf %38, %41 : vector<8x32xf32>
    %43 = arith.negf %42 : vector<8x32xf32>
    %44 = math.exp %43 : vector<8x32xf32>
    %cst_27 = arith.constant 1.000000e+00 : f32
    %45 = vector.broadcast %cst_27 : f32 to vector<8x32xf32>
    %46 = arith.addf %45, %44 : vector<8x32xf32>
    %47 = arith.divf %45, %46 : vector<8x32xf32>
    %c1_28 = arith.constant 1 : index
    %c0_29 = arith.constant 0 : index
    %c0_30 = arith.constant 0 : index
    %48 = vector.load %arg2[%c1_28, %c0_29, %c0_30] : memref<3x32x32xf32, #tpu.memory_space<vmem>>, vector<1x32x32xf32>
    %49 = vector.shape_cast %48 : vector<1x32x32xf32> to vector<32x32xf32>
    %cst_31 = arith.constant dense<0.000000e+00> : vector<8x32xf32>
    %50 = tpu.matmul %35, %49, %cst_31 {dimension_numbers = #tpu.dot_dimension_numbers<[1], [0], [0], [1], [0, 0, 1, 1], [], []>} : vector<8x32xf32>, vector<32x32xf32>, vector<8x32xf32> -> vector<8x32xf32>
    %c4 = arith.constant 4 : index
    %c0_32 = arith.constant 0 : index
    %c0_33 = arith.constant 0 : index
    %51 = vector.load %arg3[%c4, %c0_32, %c0_33] : memref<6x1x32xf32, #tpu.memory_space<vmem>>, vector<1x1x32xf32>
    %52 = vector.shape_cast %51 : vector<1x1x32xf32> to vector<1x32xf32>
    %53 = vector.broadcast %52 : vector<1x32xf32> to vector<8x32xf32>
    %54 = arith.addf %50, %53 : vector<8x32xf32>
    %55 = math.tanh %54 : vector<8x32xf32>
    %c2_34 = arith.constant 2 : index
    %c0_35 = arith.constant 0 : index
    %c0_36 = arith.constant 0 : index
    %56 = vector.load %arg2[%c2_34, %c0_35, %c0_36] : memref<3x32x32xf32, #tpu.memory_space<vmem>>, vector<1x32x32xf32>
    %57 = vector.shape_cast %56 : vector<1x32x32xf32> to vector<32x32xf32>
    %cst_37 = arith.constant dense<0.000000e+00> : vector<8x32xf32>
    %58 = tpu.matmul %35, %57, %cst_37 {dimension_numbers = #tpu.dot_dimension_numbers<[1], [0], [0], [1], [0, 0, 1, 1], [], []>} : vector<8x32xf32>, vector<32x32xf32>, vector<8x32xf32> -> vector<8x32xf32>
    %c5 = arith.constant 5 : index
    %c0_38 = arith.constant 0 : index
    %c0_39 = arith.constant 0 : index
    %59 = vector.load %arg3[%c5, %c0_38, %c0_39] : memref<6x1x32xf32, #tpu.memory_space<vmem>>, vector<1x1x32xf32>
    %60 = vector.shape_cast %59 : vector<1x1x32xf32> to vector<1x32xf32>
    %61 = vector.broadcast %60 : vector<1x32xf32> to vector<8x32xf32>
    %62 = arith.addf %58, %61 : vector<8x32xf32>
    %63 = arith.negf %62 : vector<8x32xf32>
    %64 = math.exp %63 : vector<8x32xf32>
    %cst_40 = arith.constant 1.000000e+00 : f32
    %65 = vector.broadcast %cst_40 : f32 to vector<8x32xf32>
    %66 = arith.addf %65, %64 : vector<8x32xf32>
    %67 = arith.divf %65, %66 : vector<8x32xf32>
    %68 = arith.mulf %47, %55 : vector<8x32xf32>
    %69 = math.tanh %68 : vector<8x32xf32>
    %70 = arith.mulf %67, %69 : vector<8x32xf32>
    %c0_41 = arith.constant 0 : index
    %c0_42 = arith.constant 0 : index
    %71 = vector.load %arg4[%c0_41, %c0_42] : memref<32x1xf32, #tpu.memory_space<vmem>>, vector<32x1xf32>
    %cst_43 = arith.constant dense<0.000000e+00> : vector<8x1xf32>
    %72 = tpu.matmul %70, %71, %cst_43 {dimension_numbers = #tpu.dot_dimension_numbers<[1], [0], [0], [1], [0, 0, 1, 1], [], []>} : vector<8x32xf32>, vector<32x1xf32>, vector<8x1xf32> -> vector<8x1xf32>
    %c0_44 = arith.constant 0 : index
    %c0_45 = arith.constant 0 : index
    %73 = vector.load %arg5[%c0_44, %c0_45] : memref<1x1xf32, #tpu.memory_space<vmem>>, vector<1x1xf32>
    %74 = vector.broadcast %73 : vector<1x1xf32> to vector<8x1xf32>
    %75 = arith.addf %72, %74 : vector<8x1xf32>
    %76 = arith.negf %75 : vector<8x1xf32>
    %77 = math.exp %76 : vector<8x1xf32>
    %cst_46 = arith.constant 1.000000e+00 : f32
    %78 = vector.broadcast %cst_46 : f32 to vector<8x1xf32>
    %79 = arith.addf %78, %77 : vector<8x1xf32>
    %80 = arith.divf %78, %79 : vector<8x1xf32>
    %c0_47 = arith.constant 0 : index
    %c0_48 = arith.constant 0 : index
    %81 = vector.load %arg6[%c0_47, %c0_48] : memref<8x1xf32, #tpu.memory_space<vmem>>, vector<8x1xf32>
    tpu.vector_store %arg6[%c0_47, %c0_48], %80 {strides = array<i32>} : memref<8x1xf32, #tpu.memory_space<vmem>>, vector<8x1xf32>,
    return
  }
}

</mosaic_0001>

<llo_original>
// kernel: tpu_custom_call.1
$region0: #{tpu_custom_call.1}
  #allocation0 [shape = 'u32[]', space=smem, size = 0x4, offset = 0x4, fixed_abs, tag = 'smem constant byte address 0x4 - core index']
  #allocation1 [shape = 'u32[144,128]{1,0:T(1,128)}', space=vmem, size = 0x12000, scoped, tag = 'internal scratch']
  #allocation2 [shape = 'f32[1,1]{1,0:T(1,128)S(1)}', space=vmem, size = 0x200, scoped, tag = 'scoped memory for tpu_custom_call.1']
  %s0 = inlined_call_operand.vmem [shape: f32[8,16], index: 0, kind: input, shape index: {}]
  %s1 = inlined_call_operand.hbm [shape: f32[3,16,32], index: 1, kind: input, shape index: {}]
  %s2 = inlined_call_operand.hbm [shape: f32[3,32,32], index: 2, kind: input, shape index: {}]
  %s3 = inlined_call_operand.vmem [shape: f32[6,1,32], index: 3, kind: input, shape index: {}]
  %s4 = inlined_call_operand.vmem [shape: f32[32,1], index: 4, kind: input, shape index: {}]
  %s5 = inlined_call_operand.<no memory space> [shape: f32[1,1], index: 5, kind: input, shape index: {}]
  %s6 = inlined_call_operand.vmem [shape: f32[8,1], index: 6, kind: output, shape index: {}]
  %s7 = sld [smem:[#allocation0]]
  $region42: #{tpu_custom_call.1} parent=0
    _
  %s9 = ssub.s32 1, %s7
  %s10 = scalar_select 0, %s9, %s7
  %v11 = vstv %s5
  %12 = vst [vmem:[#allocation2] sm:$0x1] %v11
  $region1: #{tpu_custom_call.1} parent=0
    #allocation3 [shape = 'u8[24576]{0}', space=vmem, size = 0x6000, scoped, tag = 'input window, operand 1, single buffered']
    #allocation4 [shape = 's32[1]{0}', space=sflag, size = 0x4, scoped, tag = 'scoped memory for tpu_custom_call.1']
    #allocation5 [shape = 'u8[49152]{0}', space=vmem, size = 0xc000, scoped, tag = 'input window, operand 2, single buffered']
    #allocation6 [shape = 's32[1]{0}', space=sflag, size = 0x4, scoped, tag = 'scoped memory for tpu_custom_call.1']
    %13 = vsyncpa [#allocation4], 0
    %14 = vsyncpa [#allocation6], 0
    // Predicated region
    $region2: #{tpu_custom_call.1} parent=1 // pred_check
      _
    $region3: #{tpu_custom_call.1} parent=1 // pred_check_branch
      %16 = sbr.rel (0) target = $region5
    $region4: #{tpu_custom_call.1} parent=1 // pred_region
      _
    $region5: #{tpu_custom_call.1} parent=1 // pred_fallthru
      _
    // Predicated region
    $region6: #{tpu_custom_call.1} parent=1 // pred_check
      _
    $region7: #{tpu_custom_call.1} parent=1 // pred_check_branch
      %18 = sbr.rel (0) target = $region9
    $region8: #{tpu_custom_call.1} parent=1 // pred_region
      %s20 = ssub.s32 768, 768
      %21 = vsyncadd [#allocation4], %s20
      %s22 = sshll.u32 [#allocation3], 4
      %s23 = int_to_ptr.vmem [resolvable:$true] %s22
      %28 = dma.hbm_to_vmem [thread:$0]  %s1, 768, %s23, [#allocation4], 128, 128, 8
    $region9: #{tpu_custom_call.1} parent=1 // pred_fallthru
      _
    // Predicated region
    $region10: #{tpu_custom_call.1} parent=1 // pred_check
      _
    $region11: #{tpu_custom_call.1} parent=1 // pred_check_branch
      %30 = sbr.rel (0) target = $region13
    $region12: #{tpu_custom_call.1} parent=1 // pred_region
      %s32 = ssub.s32 1536, 1536
      %33 = vsyncadd [#allocation6], %s32
      %s34 = sshll.u32 [#allocation5], 4
      %s35 = int_to_ptr.vmem [resolvable:$true] %s34
      %40 = dma.hbm_to_vmem [thread:$0]  %s2, 1536, %s35, [#allocation6], 128, 128, 8
    $region13: #{tpu_custom_call.1} parent=1 // pred_fallthru
      _
    // Predicated region
    $region14: #{tpu_custom_call.1} parent=1 // pred_check
      _
    $region15: #{tpu_custom_call.1} parent=1 // pred_check_branch
      %42 = sbr.rel (0) target = $region17
    $region16: #{tpu_custom_call.1} parent=1 // pred_region
      _
    $region17: #{tpu_custom_call.1} parent=1 // pred_fallthru
      _
    // Predicated region
    $region18: #{tpu_custom_call.1} parent=1 // pred_check
      _
    $region19: #{tpu_custom_call.1} parent=1 // pred_check_branch
      %44 = sbr.rel (0) target = $region21
    $region20: #{tpu_custom_call.1} parent=1 // pred_region
      _
    $region21: #{tpu_custom_call.1} parent=1 // pred_fallthru
      _
    // Predicated region
    $region22: #{tpu_custom_call.1} parent=1 // pred_check
      _
    $region23: #{tpu_custom_call.1} parent=1 // pred_check_branch
      %46 = sbr.rel (0) target = $region25
    $region24: #{tpu_custom_call.1} parent=1 // pred_region
      _
    $region25: #{tpu_custom_call.1} parent=1 // pred_fallthru
      _
    // Predicated region
    $region26: #{tpu_custom_call.1} parent=1 // pred_check
      _
    $region27: #{tpu_custom_call.1} parent=1 // pred_check_branch
      %48 = sbr.rel (0) target = $region29
    $region28: #{tpu_custom_call.1} parent=1 // pred_region
      %49 = dma.done [#allocation4], 768
    $region29: #{tpu_custom_call.1} parent=1 // pred_fallthru
      _
    // Predicated region
    $region30: #{tpu_custom_call.1} parent=1 // pred_check
      _
    $region31: #{tpu_custom_call.1} parent=1 // pred_check_branch
      %51 = sbr.rel (0) target = $region33
    $region32: #{tpu_custom_call.1} parent=1 // pred_region
      %52 = dma.done [#allocation6], 1536
    $region33: #{tpu_custom_call.1} parent=1 // pred_fallthru
      _
    %v53 = vld [vmem:[%s0] sm:$0xff]
    %v54 = vld [vmem:[#allocation3] sm:$0xff]
    %v55 = vld [vmem:[#allocation3 + $0x8] sm:$0xff]
    %v56 = vld [vmem:[%s3] sm:$0x1]
    %v58 = vlaneseq
    %v59 = vshrl.u32 %v58, 7
    %v60 = vsub.s32 0, %v59
    %v61 = vrot.slane %v56, %v60
    %vm63 = vcmask 130048
    %v65 = vsel %vm63, %v53, 0
    %67 = vmatprep.subr.mxu0 0.0
    %68 = vmatpush1.msra.mxu0 %v54
    %69 = vmatprep.subr.mxu0 0.0
    %70 = vmatpush1.msra.mxu0 %v55
    %71 = vmatprep.subr.mxu0 0.0
    %72 = vmatpush1.msra.mxu0 0.0
    %73 = vmatprep.subr.mxu0 0.0
    %74 = vmatpush1.msra.mxu0 0.0
    %75 = vmatprep.subr.mxu0 0.0
    %76 = vmatpush1.msra.mxu0 0.0
    %77 = vmatprep.subr.mxu0 0.0
    %78 = vmatpush1.msra.mxu0 0.0
    %79 = vmatprep.subr.mxu0 0.0
    %80 = vmatpush1.msra.mxu0 0.0
    %81 = vmatprep.subr.mxu0 0.0
    %82 = vmatpush1.msra.mxu0 0.0
    %83 = vmatprep.subr.mxu0 0.0
    %84 = vmatpush1.msra.mxu0 0.0
    %85 = vmatprep.subr.mxu0 0.0
    %86 = vmatpush1.msra.mxu0 0.0
    %87 = vmatprep.subr.mxu0 0.0
    %88 = vmatpush1.msra.mxu0 0.0
    %89 = vmatprep.subr.mxu0 0.0
    %90 = vmatpush1.msra.mxu0 0.0
    %91 = vmatprep.subr.mxu0 0.0
    %92 = vmatpush1.msra.mxu0 0.0
    %93 = vmatprep.subr.mxu0 0.0
    %94 = vmatpush1.msra.mxu0 0.0
    %95 = vmatprep.subr.mxu0 0.0
    %96 = vmatpush1.msra.mxu0 0.0
    %97 = vmatprep.subr.mxu0 0.0
    %98 = vmatpush1.msra.mxu0 0.0
    %99 = vmatprep.subr.mxu0 0.0
    %100 = vmatpush1.msra.mxu0 0.0
    %101 = vmatprep.subr.mxu0 0.0
    %102 = vmatpush1.msra.mxu0 0.0
    %103 = vmatprep.subr.mxu0 0.0
    %104 = vmatpush1.msra.mxu0 0.0
    %105 = vmatprep.subr.mxu0 0.0
    %106 = vmatpush1.msra.mxu0 0.0
    %107 = vmatprep.subr.mxu0 0.0
    %108 = vmatpush1.msra.mxu0 0.0
    %109 = vmatprep.subr.mxu0 0.0
    %110 = vmatpush1.msra.mxu0 0.0
    %111 = vmatprep.subr.mxu0 0.0
    %112 = vmatpush1.msra.mxu0 0.0
    %113 = vmatprep.subr.mxu0 0.0
    %114 = vmatpush1.msra.mxu0 0.0
    %115 = vmatprep.subr.mxu0 0.0
    %116 = vmatpush1.msra.mxu0 0.0
    %117 = vmatprep.subr.mxu0 0.0
    %118 = vmatpush1.msra.mxu0 0.0
    %119 = vmatprep.subr.mxu0 0.0
    %120 = vmatpush1.msra.mxu0 0.0
    %121 = vmatprep.subr.mxu0 0.0
    %122 = vmatpush1.msra.mxu0 0.0
    %123 = vmatprep.subr.mxu0 0.0
    %124 = vmatpush1.msra.mxu0 0.0
    %125 = vmatprep.subr.mxu0 0.0
    %126 = vmatpush1.msra.mxu0 0.0
    %127 = vmatprep.subr.mxu0 0.0
    %128 = vmatpush1.msra.mxu0 0.0
    %129 = vmatprep.subr.mxu0 0.0
    %130 = vmatpush1.msra.mxu0 0.0
    %131 = vmatprep.mubr.f32.mxu0 0.0
    %132 = vmatmul.mubr.f32.gmra.mrb[0].mxu0 %v65
    %v133 = vpop.f32.mrb[0].mxu0
    %v134 = vadd.f32 %v61, %v133
    %v135 = vpop.f32.mrb[0].mxu0
    %136 = vdwg.mxu0
    %v137 = vxor.u32 %v134, 2147483648
    %v138 = vmul.f32 %v137, 1.442695
    %v139 = vpow.pop %v138
    %v140 = vadd.f32 %v139, 1.0
    %v141 = vrcp.pop %v140
    %v142 = vmul.f32 1.0, %v141
    %s143 = scalar_lea.vmem [#allocation3], 16
    %v144 = vld [vmem:[%s143] sm:$0xff]
    %v145 = vld [vmem:[%s143 + $0x8] sm:$0xff]
    %s146 = scalar_lea.vmem %s3, 1
    %v147 = vld [vmem:[%s146] sm:$0x1]
    %v149 = vlaneseq
    %v150 = vshrl.u32 %v149, 7
    %v151 = vsub.s32 0, %v150
    %v152 = vrot.slane %v147, %v151
    %154 = vmatprep.subr.mxu0 0.0
    %155 = vmatpush1.msra.mxu0 %v144
    %156 = vmatprep.subr.mxu0 0.0
    %157 = vmatpush1.msra.mxu0 %v145
    %158 = vmatprep.subr.mxu0 0.0
    %159 = vmatpush1.msra.mxu0 0.0
    %160 = vmatprep.subr.mxu0 0.0
    %161 = vmatpush1.msra.mxu0 0.0
    %162 = vmatprep.subr.mxu0 0.0
    %163 = vmatpush1.msra.mxu0 0.0
    %164 = vmatprep.subr.mxu0 0.0
    %165 = vmatpush1.msra.mxu0 0.0
    %166 = vmatprep.subr.mxu0 0.0
    %167 = vmatpush1.msra.mxu0 0.0
    %168 = vmatprep.subr.mxu0 0.0
    %169 = vmatpush1.msra.mxu0 0.0
    %170 = vmatprep.subr.mxu0 0.0
    %171 = vmatpush1.msra.mxu0 0.0
    %172 = vmatprep.subr.mxu0 0.0
    %173 = vmatpush1.msra.mxu0 0.0
    %174 = vmatprep.subr.mxu0 0.0
    %175 = vmatpush1.msra.mxu0 0.0
    %176 = vmatprep.subr.mxu0 0.0
    %177 = vmatpush1.msra.mxu0 0.0
    %178 = vmatprep.subr.mxu0 0.0
    %179 = vmatpush1.msra.mxu0 0.0
    %180 = vmatprep.subr.mxu0 0.0
    %181 = vmatpush1.msra.mxu0 0.0
    %182 = vmatprep.subr.mxu0 0.0
    %183 = vmatpush1.msra.mxu0 0.0
    %184 = vmatprep.subr.mxu0 0.0
    %185 = vmatpush1.msra.mxu0 0.0
    %186 = vmatprep.subr.mxu0 0.0
    %187 = vmatpush1.msra.mxu0 0.0
    %188 = vmatprep.subr.mxu0 0.0
    %189 = vmatpush1.msra.mxu0 0.0
    %190 = vmatprep.subr.mxu0 0.0
    %191 = vmatpush1.msra.mxu0 0.0
    %192 = vmatprep.subr.mxu0 0.0
    %193 = vmatpush1.msra.mxu0 0.0
    %194 = vmatprep.subr.mxu0 0.0
    %195 = vmatpush1.msra.mxu0 0.0
    %196 = vmatprep.subr.mxu0 0.0
    %197 = vmatpush1.msra.mxu0 0.0
    %198 = vmatprep.subr.mxu0 0.0
    %199 = vmatpush1.msra.mxu0 0.0
    %200 = vmatprep.subr.mxu0 0.0
    %201 = vmatpush1.msra.mxu0 0.0
    %202 = vmatprep.subr.mxu0 0.0
    %203 = vmatpush1.msra.mxu0 0.0
    %204 = vmatprep.subr.mxu0 0.0
    %205 = vmatpush1.msra.mxu0 0.0
    %206 = vmatprep.subr.mxu0 0.0
    %207 = vmatpush1.msra.mxu0 0.0
    %208 = vmatprep.subr.mxu0 0.0
    %209 = vmatpush1.msra.mxu0 0.0
    %210 = vmatprep.subr.mxu0 0.0
    %211 = vmatpush1.msra.mxu0 0.0
    %212 = vmatprep.subr.mxu0 0.0
    %213 = vmatpush1.msra.mxu0 0.0
    %214 = vmatprep.subr.mxu0 0.0
    %215 = vmatpush1.msra.mxu0 0.0
    %216 = vmatprep.subr.mxu0 0.0
    %217 = vmatpush1.msra.mxu0 0.0
    %218 = vmatprep.mubr.f32.mxu0 0.0
    %219 = vmatmul.mubr.f32.gmra.mrb[0].mxu0 %v65
    %v220 = vpop.f32.mrb[0].mxu0
    %v221 = vadd.f32 %v152, %v220
    %v222 = vpop.f32.mrb[0].mxu0
    %223 = vdwg.mxu0
    %v224 = vtanh.pop %v221
    %s225 = scalar_lea.vmem [#allocation3], 32
    %v226 = vld [vmem:[%s225] sm:$0xff]
    %v227 = vld [vmem:[%s225 + $0x8] sm:$0xff]
    %s228 = scalar_lea.vmem %s3, 2
    %v229 = vld [vmem:[%s228] sm:$0x1]
    %v231 = vlaneseq
    %v232 = vshrl.u32 %v231, 7
    %v233 = vsub.s32 0, %v232
    %v234 = vrot.slane %v229, %v233
    %236 = vmatprep.subr.mxu0 0.0
    %237 = vmatpush1.msra.mxu0 %v226
    %238 = vmatprep.subr.mxu0 0.0
    %239 = vmatpush1.msra.mxu0 %v227
    %240 = vmatprep.subr.mxu0 0.0
    %241 = vmatpush1.msra.mxu0 0.0
    %242 = vmatprep.subr.mxu0 0.0
    %243 = vmatpush1.msra.mxu0 0.0
    %244 = vmatprep.subr.mxu0 0.0
    %245 = vmatpush1.msra.mxu0 0.0
    %246 = vmatprep.subr.mxu0 0.0
    %247 = vmatpush1.msra.mxu0 0.0
    %248 = vmatprep.subr.mxu0 0.0
    %249 = vmatpush1.msra.mxu0 0.0
    %250 = vmatprep.subr.mxu0 0.0
    %251 = vmatpush1.msra.mxu0 0.0
    %252 = vmatprep.subr.mxu0 0.0
    %253 = vmatpush1.msra.mxu0 0.0
    %254 = vmatprep.subr.mxu0 0.0
    %255 = vmatpush1.msra.mxu0 0.0
    %256 = vmatprep.subr.mxu0 0.0
    %257 = vmatpush1.msra.mxu0 0.0
    %258 = vmatprep.subr.mxu0 0.0
    %259 = vmatpush1.msra.mxu0 0.0
    %260 = vmatprep.subr.mxu0 0.0
    %261 = vmatpush1.msra.mxu0 0.0
    %262 = vmatprep.subr.mxu0 0.0
    %263 = vmatpush1.msra.mxu0 0.0
    %264 = vmatprep.subr.mxu0 0.0
    %265 = vmatpush1.msra.mxu0 0.0
    %266 = vmatprep.subr.mxu0 0.0
    %267 = vmatpush1.msra.mxu0 0.0
    %268 = vmatprep.subr.mxu0 0.0
    %269 = vmatpush1.msra.mxu0 0.0
    %270 = vmatprep.subr.mxu0 0.0
    %271 = vmatpush1.msra.mxu0 0.0
    %272 = vmatprep.subr.mxu0 0.0
    %273 = vmatpush1.msra.mxu0 0.0
    %274 = vmatprep.subr.mxu0 0.0
    %275 = vmatpush1.msra.mxu0 0.0
    %276 = vmatprep.subr.mxu0 0.0
    %277 = vmatpush1.msra.mxu0 0.0
    %278 = vmatprep.subr.mxu0 0.0
    %279 = vmatpush1.msra.mxu0 0.0
    %280 = vmatprep.subr.mxu0 0.0
    %281 = vmatpush1.msra.mxu0 0.0
    %282 = vmatprep.subr.mxu0 0.0
    %283 = vmatpush1.msra.mxu0 0.0
    %284 = vmatprep.subr.mxu0 0.0
    %285 = vmatpush1.msra.mxu0 0.0
    %286 = vmatprep.subr.mxu0 0.0
    %287 = vmatpush1.msra.mxu0 0.0
    %288 = vmatprep.subr.mxu0 0.0
    %289 = vmatpush1.msra.mxu0 0.0
    %290 = vmatprep.subr.mxu0 0.0
    %291 = vmatpush1.msra.mxu0 0.0
    %292 = vmatprep.subr.mxu0 0.0
    %293 = vmatpush1.msra.mxu0 0.0
    %294 = vmatprep.subr.mxu0 0.0
    %295 = vmatpush1.msra.mxu0 0.0
    %296 = vmatprep.subr.mxu0 0.0
    %297 = vmatpush1.msra.mxu0 0.0
    %298 = vmatprep.subr.mxu0 0.0
    %299 = vmatpush1.msra.mxu0 0.0
    %300 = vmatprep.mubr.f32.mxu0 0.0
    %301 = vmatmul.mubr.f32.gmra.mrb[0].mxu0 %v65
    %v302 = vpop.f32.mrb[0].mxu0
    %v303 = vadd.f32 %v234, %v302
    %v304 = vpop.f32.mrb[0].mxu0
    %305 = vdwg.mxu0
    %v306 = vxor.u32 %v303, 2147483648
    %v307 = vmul.f32 %v306, 1.442695
    %v308 = vpow.pop %v307
    %v309 = vadd.f32 %v308, 1.0
    %v310 = vrcp.pop %v309
    %v311 = vmul.f32 1.0, %v310
    %v312 = vmul.f32 %v142, %v224
    %v313 = vtanh.pop %v312
    %v314 = vmul.f32 %v311, %v313
    %v315 = vld [vmem:[#allocation5] sm:$0xff]
    %v316 = vld [vmem:[#allocation5 + $0x8] sm:$0xff]
    %v317 = vld [vmem:[#allocation5 + $0x10] sm:$0xff]
    %v318 = vld [vmem:[#allocation5 + $0x18] sm:$0xff]
    %s319 = scalar_lea.vmem %s3, 3
    %v320 = vld [vmem:[%s319] sm:$0x1]
    %v322 = vlaneseq
    %v323 = vshrl.u32 %v322, 7
    %v324 = vsub.s32 0, %v323
    %v325 = vrot.slane %v320, %v324
    %vm327 = vcmask 261120
    %v329 = vsel %vm327, %v314, 0
    %331 = vmatprep.subr.mxu0 0.0
    %332 = vmatpush1.msra.mxu0 %v315
    %333 = vmatprep.subr.mxu0 0.0
    %334 = vmatpush1.msra.mxu0 %v316
    %335 = vmatprep.subr.mxu0 0.0
    %336 = vmatpush1.msra.mxu0 %v317
    %337 = vmatprep.subr.mxu0 0.0
    %338 = vmatpush1.msra.mxu0 %v318
    %339 = vmatprep.subr.mxu0 0.0
    %340 = vmatpush1.msra.mxu0 0.0
    %341 = vmatprep.subr.mxu0 0.0
    %342 = vmatpush1.msra.mxu0 0.0
    %343 = vmatprep.subr.mxu0 0.0
    %344 = vmatpush1.msra.mxu0 0.0
    %345 = vmatprep.subr.mxu0 0.0
    %346 = vmatpush1.msra.mxu0 0.0
    %347 = vmatprep.subr.mxu0 0.0
    %348 = vmatpush1.msra.mxu0 0.0
    %349 = vmatprep.subr.mxu0 0.0
    %350 = vmatpush1.msra.mxu0 0.0
    %351 = vmatprep.subr.mxu0 0.0
    %352 = vmatpush1.msra.mxu0 0.0
    %353 = vmatprep.subr.mxu0 0.0
    %354 = vmatpush1.msra.mxu0 0.0
    %355 = vmatprep.subr.mxu0 0.0
    %356 = vmatpush1.msra.mxu0 0.0
    %357 = vmatprep.subr.mxu0 0.0
    %358 = vmatpush1.msra.mxu0 0.0
    %359 = vmatprep.subr.mxu0 0.0
    %360 = vmatpush1.msra.mxu0 0.0
    %361 = vmatprep.subr.mxu0 0.0
    %362 = vmatpush1.msra.mxu0 0.0
    %363 = vmatprep.subr.mxu0 0.0
    %364 = vmatpush1.msra.mxu0 0.0
    %365 = vmatprep.subr.mxu0 0.0
    %366 = vmatpush1.msra.mxu0 0.0
    %367 = vmatprep.subr.mxu0 0.0
    %368 = vmatpush1.msra.mxu0 0.0
    %369 = vmatprep.subr.mxu0 0.0
    %370 = vmatpush1.msra.mxu0 0.0
    %371 = vmatprep.subr.mxu0 0.0
    %372 = vmatpush1.msra.mxu0 0.0
    %373 = vmatprep.subr.mxu0 0.0
    %374 = vmatpush1.msra.mxu0 0.0
    %375 = vmatprep.subr.mxu0 0.0
    %376 = vmatpush1.msra.mxu0 0.0
    %377 = vmatprep.subr.mxu0 0.0
    %378 = vmatpush1.msra.mxu0 0.0
    %379 = vmatprep.subr.mxu0 0.0
    %380 = vmatpush1.msra.mxu0 0.0
    %381 = vmatprep.subr.mxu0 0.0
    %382 = vmatpush1.msra.mxu0 0.0
    %383 = vmatprep.subr.mxu0 0.0
    %384 = vmatpush1.msra.mxu0 0.0
    %385 = vmatprep.subr.mxu0 0.0
    %386 = vmatpush1.msra.mxu0 0.0
    %387 = vmatprep.subr.mxu0 0.0
    %388 = vmatpush1.msra.mxu0 0.0
    %389 = vmatprep.subr.mxu0 0.0
    %390 = vmatpush1.msra.mxu0 0.0
    %391 = vmatprep.subr.mxu0 0.0
    %392 = vmatpush1.msra.mxu0 0.0
    %393 = vmatprep.subr.mxu0 0.0
    %394 = vmatpush1.msra.mxu0 0.0
    %395 = vmatprep.mubr.f32.mxu0 0.0
    %396 = vmatmul.mubr.f32.gmra.mrb[0].mxu0 %v329
    %v397 = vpop.f32.mrb[0].mxu0
    %v398 = vadd.f32 %v325, %v397
    %v399 = vpop.f32.mrb[0].mxu0
    %400 = vdwg.mxu0
    %v401 = vxor.u32 %v398, 2147483648
    %v402 = vmul.f32 %v401, 1.442695
    %v403 = vpow.pop %v402
    %v404 = vadd.f32 %v403, 1.0
    %v405 = vrcp.pop %v404
    %v406 = vmul.f32 1.0, %v405
    %s407 = scalar_lea.vmem [#allocation5], 32
    %v408 = vld [vmem:[%s407] sm:$0xff]
    %v409 = vld [vmem:[%s407 + $0x8] sm:$0xff]
    %v410 = vld [vmem:[%s407 + $0x10] sm:$0xff]
    %v411 = vld [vmem:[%s407 + $0x18] sm:$0xff]
    %s412 = scalar_lea.vmem %s3, 4
    %v413 = vld [vmem:[%s412] sm:$0x1]
    %v415 = vlaneseq
    %v416 = vshrl.u32 %v415, 7
    %v417 = vsub.s32 0, %v416
    %v418 = vrot.slane %v413, %v417
    %420 = vmatprep.subr.mxu0 0.0
    %421 = vmatpush1.msra.mxu0 %v408
    %422 = vmatprep.subr.mxu0 0.0
    %423 = vmatpush1.msra.mxu0 %v409
    %424 = vmatprep.subr.mxu0 0.0
    %425 = vmatpush1.msra.mxu0 %v410
    %426 = vmatprep.subr.mxu0 0.0
    %427 = vmatpush1.msra.mxu0 %v411
    %428 = vmatprep.subr.mxu0 0.0
    %429 = vmatpush1.msra.mxu0 0.0
    %430 = vmatprep.subr.mxu0 0.0
    %431 = vmatpush1.msra.mxu0 0.0
    %432 = vmatprep.subr.mxu0 0.0
    %433 = vmatpush1.msra.mxu0 0.0
    %434 = vmatprep.subr.mxu0 0.0
    %435 = vmatpush1.msra.mxu0 0.0
    %436 = vmatprep.subr.mxu0 0.0
    %437 = vmatpush1.msra.mxu0 0.0
    %438 = vmatprep.subr.mxu0 0.0
    %439 = vmatpush1.msra.mxu0 0.0
    %440 = vmatprep.subr.mxu0 0.0
    %441 = vmatpush1.msra.mxu0 0.0
    %442 = vmatprep.subr.mxu0 0.0
    %443 = vmatpush1.msra.mxu0 0.0
    %444 = vmatprep.subr.mxu0 0.0
    %445 = vmatpush1.msra.mxu0 0.0
    %446 = vmatprep.subr.mxu0 0.0
    %447 = vmatpush1.msra.mxu0 0.0
    %448 = vmatprep.subr.mxu0 0.0
    %449 = vmatpush1.msra.mxu0 0.0
    %450 = vmatprep.subr.mxu0 0.0
    %451 = vmatpush1.msra.mxu0 0.0
    %452 = vmatprep.subr.mxu0 0.0
    %453 = vmatpush1.msra.mxu0 0.0
    %454 = vmatprep.subr.mxu0 0.0
    %455 = vmatpush1.msra.mxu0 0.0
    %456 = vmatprep.subr.mxu0 0.0
    %457 = vmatpush1.msra.mxu0 0.0
    %458 = vmatprep.subr.mxu0 0.0
    %459 = vmatpush1.msra.mxu0 0.0
    %460 = vmatprep.subr.mxu0 0.0
    %461 = vmatpush1.msra.mxu0 0.0
    %462 = vmatprep.subr.mxu0 0.0
    %463 = vmatpush1.msra.mxu0 0.0
    %464 = vmatprep.subr.mxu0 0.0
    %465 = vmatpush1.msra.mxu0 0.0
    %466 = vmatprep.subr.mxu0 0.0
    %467 = vmatpush1.msra.mxu0 0.0
    %468 = vmatprep.subr.mxu0 0.0
    %469 = vmatpush1.msra.mxu0 0.0
    %470 = vmatprep.subr.mxu0 0.0
    %471 = vmatpush1.msra.mxu0 0.0
    %472 = vmatprep.subr.mxu0 0.0
    %473 = vmatpush1.msra.mxu0 0.0
    %474 = vmatprep.subr.mxu0 0.0
    %475 = vmatpush1.msra.mxu0 0.0
    %476 = vmatprep.subr.mxu0 0.0
    %477 = vmatpush1.msra.mxu0 0.0
    %478 = vmatprep.subr.mxu0 0.0
    %479 = vmatpush1.msra.mxu0 0.0
    %480 = vmatprep.subr.mxu0 0.0
    %481 = vmatpush1.msra.mxu0 0.0
    %482 = vmatprep.subr.mxu0 0.0
    %483 = vmatpush1.msra.mxu0 0.0
    %484 = vmatprep.mubr.f32.mxu0 0.0
    %485 = vmatmul.mubr.f32.gmra.mrb[0].mxu0 %v329
    %v486 = vpop.f32.mrb[0].mxu0
    %v487 = vadd.f32 %v418, %v486
    %v488 = vpop.f32.mrb[0].mxu0
    %489 = vdwg.mxu0
    %v490 = vtanh.pop %v487
    %s491 = scalar_lea.vmem [#allocation5], 64
    %v492 = vld [vmem:[%s491] sm:$0xff]
    %v493 = vld [vmem:[%s491 + $0x8] sm:$0xff]
    %v494 = vld [vmem:[%s491 + $0x10] sm:$0xff]
    %v495 = vld [vmem:[%s491 + $0x18] sm:$0xff]
    %s496 = scalar_lea.vmem %s3, 5
    %v497 = vld [vmem:[%s496] sm:$0x1]
    %v499 = vlaneseq
    %v500 = vshrl.u32 %v499, 7
    %v501 = vsub.s32 0, %v500
    %v502 = vrot.slane %v497, %v501
    %504 = vmatprep.subr.mxu0 0.0
    %505 = vmatpush1.msra.mxu0 %v492
    %506 = vmatprep.subr.mxu0 0.0
    %507 = vmatpush1.msra.mxu0 %v493
    %508 = vmatprep.subr.mxu0 0.0
    %509 = vmatpush1.msra.mxu0 %v494
    %510 = vmatprep.subr.mxu0 0.0
    %511 = vmatpush1.msra.mxu0 %v495
    %512 = vmatprep.subr.mxu0 0.0
    %513 = vmatpush1.msra.mxu0 0.0
    %514 = vmatprep.subr.mxu0 0.0
    %515 = vmatpush1.msra.mxu0 0.0
    %516 = vmatprep.subr.mxu0 0.0
    %517 = vmatpush1.msra.mxu0 0.0
    %518 = vmatprep.subr.mxu0 0.0
    %519 = vmatpush1.msra.mxu0 0.0
    %520 = vmatprep.subr.mxu0 0.0
    %521 = vmatpush1.msra.mxu0 0.0
    %522 = vmatprep.subr.mxu0 0.0
    %523 = vmatpush1.msra.mxu0 0.0
    %524 = vmatprep.subr.mxu0 0.0
    %525 = vmatpush1.msra.mxu0 0.0
    %526 = vmatprep.subr.mxu0 0.0
    %527 = vmatpush1.msra.mxu0 0.0
    %528 = vmatprep.subr.mxu0 0.0
    %529 = vmatpush1.msra.mxu0 0.0
    %530 = vmatprep.subr.mxu0 0.0
    %531 = vmatpush1.msra.mxu0 0.0
    %532 = vmatprep.subr.mxu0 0.0
    %533 = vmatpush1.msra.mxu0 0.0
    %534 = vmatprep.subr.mxu0 0.0
    %535 = vmatpush1.msra.mxu0 0.0
    %536 = vmatprep.subr.mxu0 0.0
    %537 = vmatpush1.msra.mxu0 0.0
    %538 = vmatprep.subr.mxu0 0.0
    %539 = vmatpush1.msra.mxu0 0.0
    %540 = vmatprep.subr.mxu0 0.0
    %541 = vmatpush1.msra.mxu0 0.0
    %542 = vmatprep.subr.mxu0 0.0
    %543 = vmatpush1.msra.mxu0 0.0
    %544 = vmatprep.subr.mxu0 0.0
    %545 = vmatpush1.msra.mxu0 0.0
    %546 = vmatprep.subr.mxu0 0.0
    %547 = vmatpush1.msra.mxu0 0.0
    %548 = vmatprep.subr.mxu0 0.0
    %549 = vmatpush1.msra.mxu0 0.0
    %550 = vmatprep.subr.mxu0 0.0
    %551 = vmatpush1.msra.mxu0 0.0
    %552 = vmatprep.subr.mxu0 0.0
    %553 = vmatpush1.msra.mxu0 0.0
    %554 = vmatprep.subr.mxu0 0.0
    %555 = vmatpush1.msra.mxu0 0.0
    %556 = vmatprep.subr.mxu0 0.0
    %557 = vmatpush1.msra.mxu0 0.0
    %558 = vmatprep.subr.mxu0 0.0
    %559 = vmatpush1.msra.mxu0 0.0
    %560 = vmatprep.subr.mxu0 0.0
    %561 = vmatpush1.msra.mxu0 0.0
    %562 = vmatprep.subr.mxu0 0.0
    %563 = vmatpush1.msra.mxu0 0.0
    %564 = vmatprep.subr.mxu0 0.0
    %565 = vmatpush1.msra.mxu0 0.0
    %566 = vmatprep.subr.mxu0 0.0
    %567 = vmatpush1.msra.mxu0 0.0
    %568 = vmatprep.mubr.f32.mxu0 0.0
    %569 = vmatmul.mubr.f32.gmra.mrb[0].mxu0 %v329
    %v570 = vpop.f32.mrb[0].mxu0
    %v571 = vadd.f32 %v502, %v570
    %v572 = vpop.f32.mrb[0].mxu0
    %573 = vdwg.mxu0
    %v574 = vxor.u32 %v571, 2147483648
    %v575 = vmul.f32 %v574, 1.442695
    %v576 = vpow.pop %v575
    %v577 = vadd.f32 %v576, 1.0
    %v578 = vrcp.pop %v577
    %v579 = vmul.f32 1.0, %v578
    %v580 = vmul.f32 %v406, %v490
    %v581 = vtanh.pop %v580
    %v582 = vmul.f32 %v579, %v581
    %v583 = vld [vmem:[%s4] sm:$0xff]
    %v584 = vld [vmem:[%s4 + $0x8] sm:$0xff]
    %v585 = vld [vmem:[%s4 + $0x10] sm:$0xff]
    %v586 = vld [vmem:[%s4 + $0x18] sm:$0xff]
    %v587 = vld [vmem:[#allocation2] sm:$0x1]
    %v589 = vlaneseq
    %v590 = vshrl.u32 %v589, 7
    %v591 = vsub.s32 0, %v590
    %v592 = vrot.slane %v587, %v591
    %v595 = vsel %vm327, %v582, 0
    %597 = vmatprep.subr.mxu0 0.0
    %598 = vmatpush1.msra.mxu0 %v583
    %599 = vmatprep.subr.mxu0 0.0
    %600 = vmatpush1.msra.mxu0 %v584
    %601 = vmatprep.subr.mxu0 0.0
    %602 = vmatpush1.msra.mxu0 %v585
    %603 = vmatprep.subr.mxu0 0.0
    %604 = vmatpush1.msra.mxu0 %v586
    %605 = vmatprep.subr.mxu0 0.0
    %606 = vmatpush1.msra.mxu0 0.0
    %607 = vmatprep.subr.mxu0 0.0
    %608 = vmatpush1.msra.mxu0 0.0
    %609 = vmatprep.subr.mxu0 0.0
    %610 = vmatpush1.msra.mxu0 0.0
    %611 = vmatprep.subr.mxu0 0.0
    %612 = vmatpush1.msra.mxu0 0.0
    %613 = vmatprep.subr.mxu0 0.0
    %614 = vmatpush1.msra.mxu0 0.0
    %615 = vmatprep.subr.mxu0 0.0
    %616 = vmatpush1.msra.mxu0 0.0
    %617 = vmatprep.subr.mxu0 0.0
    %618 = vmatpush1.msra.mxu0 0.0
    %619 = vmatprep.subr.mxu0 0.0
    %620 = vmatpush1.msra.mxu0 0.0
    %621 = vmatprep.subr.mxu0 0.0
    %622 = vmatpush1.msra.mxu0 0.0
    %623 = vmatprep.subr.mxu0 0.0
    %624 = vmatpush1.msra.mxu0 0.0
    %625 = vmatprep.subr.mxu0 0.0
    %626 = vmatpush1.msra.mxu0 0.0
    %627 = vmatprep.subr.mxu0 0.0
    %628 = vmatpush1.msra.mxu0 0.0
    %629 = vmatprep.subr.mxu0 0.0
    %630 = vmatpush1.msra.mxu0 0.0
    %631 = vmatprep.subr.mxu0 0.0
    %632 = vmatpush1.msra.mxu0 0.0
    %633 = vmatprep.subr.mxu0 0.0
    %634 = vmatpush1.msra.mxu0 0.0
    %635 = vmatprep.subr.mxu0 0.0
    %636 = vmatpush1.msra.mxu0 0.0
    %637 = vmatprep.subr.mxu0 0.0
    %638 = vmatpush1.msra.mxu0 0.0
    %639 = vmatprep.subr.mxu0 0.0
    %640 = vmatpush1.msra.mxu0 0.0
    %641 = vmatprep.subr.mxu0 0.0
    %642 = vmatpush1.msra.mxu0 0.0
    %643 = vmatprep.subr.mxu0 0.0
    %644 = vmatpush1.msra.mxu0 0.0
    %645 = vmatprep.subr.mxu0 0.0
    %646 = vmatpush1.msra.mxu0 0.0
    %647 = vmatprep.subr.mxu0 0.0
    %648 = vmatpush1.msra.mxu0 0.0
    %649 = vmatprep.subr.mxu0 0.0
    %650 = vmatpush1.msra.mxu0 0.0
    %651 = vmatprep.subr.mxu0 0.0
    %652 = vmatpush1.msra.mxu0 0.0
    %653 = vmatprep.subr.mxu0 0.0
    %654 = vmatpush1.msra.mxu0 0.0
    %655 = vmatprep.subr.mxu0 0.0
    %656 = vmatpush1.msra.mxu0 0.0
    %657 = vmatprep.subr.mxu0 0.0
    %658 = vmatpush1.msra.mxu0 0.0
    %659 = vmatprep.subr.mxu0 0.0
    %660 = vmatpush1.msra.mxu0 0.0
    %661 = vmatprep.mubr.f32.mxu0 0.0
    %662 = vmatmul.mubr.f32.gmra.mrb[0].mxu0 %v595
    %v663 = vpop.f32.mrb[0].mxu0
    %v664 = vadd.f32 %v592, %v663
    %v665 = vpop.f32.mrb[0].mxu0
    %666 = vdwg.mxu0
    %v667 = vxor.u32 %v664, 2147483648
    %v668 = vmul.f32 %v667, 1.442695
    %v669 = vpow.pop %v668
    %v670 = vadd.f32 %v669, 1.0
    %v671 = vrcp.pop %v670
    %v672 = vmul.f32 1.0, %v671
    %vm673 = vcmask 7168
    %674 = vst.msk [vmem:[%s6] sm:$0xff] %vm673, %v672
    // Predicated region
    $region34: #{tpu_custom_call.1} parent=1 // pred_check
      _
    $region35: #{tpu_custom_call.1} parent=1 // pred_check_branch
      %676 = sbr.rel (0) target = $region37
    $region36: #{tpu_custom_call.1} parent=1 // pred_region
      _
    $region37: #{tpu_custom_call.1} parent=1 // pred_fallthru
      _
    // Predicated region
    $region38: #{tpu_custom_call.1} parent=1 // pred_check
      _
    $region39: #{tpu_custom_call.1} parent=1 // pred_check_branch
      %678 = sbr.rel (0) target = $region41
    $region40: #{tpu_custom_call.1} parent=1 // pred_region
      _
    $region41: #{tpu_custom_call.1} parent=1 // pred_fallthru
      _
    %679 = vsyncpa [#allocation4], 1
    %680 = vsyncpa [#allocation6], 1

</llo_original>
